<compile_context>
chip_gen: v7x
topology: tpu7x:2x2x1
jax: 0.10.0
libtpu: 0.0.40
codegen_flags: <defaults>
</compile_context>

<pallas_src>
import jax
import jax.numpy as jnp
from jax.experimental import pallas as pl
from jax.experimental.pallas import tpu as pltpu


# --------------------------------------------------------------------------- #
# Kernel
# --------------------------------------------------------------------------- #
def _affine_kernel(x_ref, w_ref, b_ref, o_ref):
    """out = W_total @ x + b_total, feature-major (batch on the 128-lane axis).

    x_ref : (F, TN)  activations (any float dtype; cast to the weight dtype)
    w_ref : (O, F)   collapsed weight (resident every grid step)
    b_ref : (O, 1)   collapsed bias, f32 (broadcasts across lanes)
    o_ref : (O, TN)  output tile
    """
    w = w_ref[...]
    x = x_ref[...].astype(w.dtype)          # VPU cast; MXU gets matching dtypes
    acc = jnp.dot(w, x, preferred_element_type=jnp.float32)
    o_ref[...] = (acc + b_ref[...]).astype(o_ref.dtype)


# --------------------------------------------------------------------------- #
# Tiling helpers
# --------------------------------------------------------------------------- #
def _cdiv(a, b):
    return -(-a // b)


def _num_tensorcores():
    """Best-effort TensorCore count per chip (v7x has 2, v5e/v6e have 1)."""
    try:
        dev = jax.devices()[0]
        kind = (getattr(dev, "device_kind", "") or "").lower()
        if "v7" in kind:
            return 2
        nc = getattr(dev, "num_cores", None)
        return int(nc) if nc else 1
    except Exception:
        return 1


def _choose_tiling(n, *, max_tile_n=32768, num_cores=None):
    """Pick (tile_n, steps, n_pad): 128-multiple batch tiles, as big as allowed.

    On multi-TC chips require >= 2 steps per core (so each core's input DMA can
    pipeline); on 1-TC chips a single large tile is preferred when it fits.
    """
    if num_cores is None:
        num_cores = _num_tensorcores()
    n128 = _cdiv(n, 128) * 128
    tile = max(128, min(max_tile_n, n128) // 128 * 128)
    steps = _cdiv(n128, tile)
    min_steps = 2 * num_cores if num_cores > 1 else 1
    steps = max(steps, min(min_steps, n128 // 128))
    # Re-balance the tile so padding waste stays small.
    tile = _cdiv(_cdiv(n128, steps), 128) * 128
    steps = _cdiv(n128, tile)
    return tile, steps, steps * tile


# --------------------------------------------------------------------------- #
# Forward wrapper
# --------------------------------------------------------------------------- #
def blob_model_forward(x, params, *, stream_dtype=jnp.bfloat16, out_dtype=None,
                       max_tile_n=32768, min_pallas_batch=512,
                       x_feature_major=False, out_feature_major=False):
    """Fused BlobModel forward.

    x: (N, F) (or (F, N) if x_feature_major). params in torch layout:
    W: (out_features, in_features), b: (out_features,).
    stream_dtype: MXU operand dtype (default bf16; accumulation stays f32;
    pass None for full-f32 operands).
    """
    w1, b1, w2, b2, w3, b3 = params
    f = w1.shape[1]
    o = w3.shape[0]
    out_dtype = x.dtype if out_dtype is None else out_dtype

    # Exact algebraic collapse of the three affine layers (no nonlinearities).
    w_total = (w3 @ (w2 @ w1)).astype(jnp.float32)               # (O, F)
    b_total = (w3 @ (w2 @ b1 + b2) + b3).astype(jnp.float32)     # (O,)

    if x_feature_major:
        assert x.shape[0] == f
        n = x.shape[1]
    else:
        assert x.shape[1] == f
        n = x.shape[0]

    # Small-batch dispatch: kernel / relayout overhead dominates tiny batches.
    if n < min_pallas_batch:
        xb = x.T if x_feature_major else x
        out = (xb @ w_total.T + b_total).astype(out_dtype)
        return out.T if out_feature_major else out

    tile_n, steps, n_pad = _choose_tiling(n, max_tile_n=max_tile_n)

    # Feature-major activations: batch on the 128-lane axis (layout plumbing;
    # callers holding feature-major tensors skip this entirely).
    x_t = x if x_feature_major else jnp.transpose(x)             # (F, N)
    if n_pad != n:
        x_t = jnp.pad(x_t, ((0, 0), (0, n_pad - n)))

    w_k = w_total if stream_dtype is None else w_total.astype(stream_dtype)
    b_k = b_total.reshape(o, 1)          # f32 bias add (v5e VPU has no bf16)

    cols = lambda i: (0, i)              # activations / output: tile over lanes
    full = lambda i: (0, 0)              # weight / bias: resident every step

    flops = 2 * n * f * o
    bytes_accessed = int(
        x_t.size * x_t.dtype.itemsize
        + n_pad * o * jnp.dtype(out_dtype).itemsize
        + w_k.size * w_k.dtype.itemsize
        + b_k.size * b_k.dtype.itemsize)

    out_t = pl.pallas_call(
        _affine_kernel,
        out_shape=jax.ShapeDtypeStruct((o, n_pad), out_dtype),
        grid_spec=pltpu.PrefetchScalarGridSpec(
            num_scalar_prefetch=0,
            grid=(steps,),
            in_specs=[
                pl.BlockSpec((f, tile_n), cols),   # x^T      (F, TN)
                pl.BlockSpec((o, f), full),        # W_total  (O, F)
                pl.BlockSpec((o, 1), full),        # b_total  (O, 1)
            ],
            out_specs=pl.BlockSpec((o, tile_n), cols),
        ),
        compiler_params=pltpu.CompilerParams(
            dimension_semantics=("parallel",)),
        cost_estimate=pl.CostEstimate(
            flops=flops, transcendentals=0, bytes_accessed=bytes_accessed),
    )(x_t, w_k, b_k)

    out_t = out_t[:, :n] if n_pad != n else out_t
    return out_t if out_feature_major else jnp.transpose(out_t)


# --------------------------------------------------------------------------- #
# Params init (torch nn.Linear-style)
# --------------------------------------------------------------------------- #
def init_blob_params(key, input_features, output_features, hidden_units=8):
    """nn.Linear-style init: U(-1/sqrt(fan_in), 1/sqrt(fan_in)); torch layout."""
    ks = jax.random.split(key, 6)

    def linear(kw, kb, fan_in, fan_out):
        bound = 1.0 / jnp.sqrt(float(fan_in))
        w = jax.random.uniform(kw, (fan_out, fan_in), jnp.float32, -bound, bound)
        b = jax.random.uniform(kb, (fan_out,), jnp.float32, -bound, bound)
        return w, b

    w1, b1 = linear(ks[0], ks[1], input_features, hidden_units)
    w2, b2 = linear(ks[2], ks[3], hidden_units, hidden_units)
    w3, b3 = linear(ks[4], ks[5], hidden_units, output_features)
    return (w1, b1, w2, b2, w3, b3)


# --------------------------------------------------------------------------- #
# Demo / correctness check
# --------------------------------------------------------------------------- #
if __name__ == "__main__":
    INPUT_FEATURES = 4
    OUTPUT_FEATURES = 4
    HIDDEN_UNITS = 8
    BATCH = 1024   # large enough to take the Pallas path (lane-dense tiles)

    key = jax.random.PRNGKey(0)
    k_x, k_p = jax.random.split(key)

    x = jax.random.normal(k_x, (BATCH, INPUT_FEATURES), dtype=jnp.float32)
    params = init_blob_params(k_p, INPUT_FEATURES, OUTPUT_FEATURES, HIDDEN_UNITS)

    out = jax.block_until_ready(blob_model_forward(x, params))
    assert out.shape == (BATCH, OUTPUT_FEATURES)
    assert out.dtype == x.dtype

    w1, b1, w2, b2, w3, b3 = params

    # (1) Exact-semantics check: same collapsed weights, same bf16 operand
    #     rounding, f32 accumulation -> tight tolerance (validates kernel math).
    w_total = w3 @ (w2 @ w1)
    b_total = w3 @ (w2 @ b1 + b2) + b3
    ref_bf = jnp.dot(x.astype(jnp.bfloat16), w_total.astype(jnp.bfloat16).T,
                     preferred_element_type=jnp.float32) + b_total[None, :]
    assert jnp.allclose(out, ref_bf, atol=1e-4, rtol=1e-4), "kernel math mismatch"

    # (2) Fidelity vs. the original f32 3-layer forward (bf16 streaming error).
    ref_f32 = ((x @ w1.T + b1) @ w2.T + b2) @ w3.T + b3
    assert float(jnp.max(jnp.abs(out - ref_f32))) < 0.1, "bf16 fidelity too loose"

    print("KERNEL_OK")
</pallas_src>

<mosaic_0001>
module attributes {stable_mosaic.version = 11 : i64} {
  func.func @_affine_kernel(%arg0: i32, %arg1: memref<4x1024xf32, #tpu.memory_space<vmem>>, %arg2: memref<4x4xbf16, #tpu.memory_space<vmem>>, %arg3: memref<4x1xf32, #tpu.memory_space<vmem>>, %arg4: memref<4x1024xf32, #tpu.memory_space<vmem>>) attributes {dimension_semantics = [#tpu.dimension_semantics<parallel>], iteration_bounds = array<i64: 1>, scalar_prefetch = 0 : i64, scratch_operands = 0 : i64, tpu.core_type = #tpu.core_type<tc>, window_params = [{transform_indices = @transform_0, window_bounds = array<i64: 4, 1024>}, {pipeline_mode = #tpu.pipeline_mode<synchronous>, transform_indices = @transform_1, window_bounds = array<i64: 4, 4>}, {pipeline_mode = #tpu.pipeline_mode<synchronous>, transform_indices = @transform_2, window_bounds = array<i64: 4, 1>}, {transform_indices = @transform_3, window_bounds = array<i64: 4, 1024>}]} {
    %c0 = arith.constant 0 : index
    %c0_0 = arith.constant 0 : index
    %0 = vector.load %arg2[%c0, %c0_0] : memref<4x4xbf16, #tpu.memory_space<vmem>>, vector<4x4xbf16>
    %c0_1 = arith.constant 0 : index
    %c0_2 = arith.constant 0 : index
    %1 = vector.load %arg1[%c0_1, %c0_2] : memref<4x1024xf32, #tpu.memory_space<vmem>>, vector<4x1024xf32>
    %2 = arith.truncf %1 : vector<4x1024xf32> to vector<4x1024xbf16>
    %cst = arith.constant dense<0.000000e+00> : vector<4x1024xf32>
    %3 = tpu.matmul %0, %2, %cst {dimension_numbers = #tpu.dot_dimension_numbers<[1], [0], [0], [1], [0, 0, 1, 1], [], []>} : vector<4x4xbf16>, vector<4x1024xbf16>, vector<4x1024xf32> -> vector<4x1024xf32>
    %c0_3 = arith.constant 0 : index
    %c0_4 = arith.constant 0 : index
    %4 = vector.load %arg3[%c0_3, %c0_4] : memref<4x1xf32, #tpu.memory_space<vmem>>, vector<4x1xf32>
    %5 = vector.broadcast %4 : vector<4x1xf32> to vector<4x1024xf32>
    %6 = arith.addf %3, %5 : vector<4x1024xf32>
    %c0_5 = arith.constant 0 : index
    %c0_6 = arith.constant 0 : index
    %7 = vector.load %arg4[%c0_5, %c0_6] : memref<4x1024xf32, #tpu.memory_space<vmem>>, vector<4x1024xf32>
    tpu.vector_store %arg4[%c0_5, %c0_6], %6 {strides = array<i32>} : memref<4x1024xf32, #tpu.memory_space<vmem>>, vector<4x1024xf32>,
    return
  }
  func.func @transform_0(%arg0: i32) -> (i32, i32) {
    %c0_i32 = arith.constant 0 : i32
    %c0_i32_0 = arith.constant 0 : i32
    return %c0_i32, %arg0 : i32, i32
  }
  func.func @transform_1(%arg0: i32) -> (i32, i32) {
    %c0_i32 = arith.constant 0 : i32
    %c0_i32_0 = arith.constant 0 : i32
    %c0_i32_1 = arith.constant 0 : i32
    return %c0_i32, %c0_i32_0 : i32, i32
  }
  func.func @transform_2(%arg0: i32) -> (i32, i32) {
    %c0_i32 = arith.constant 0 : i32
    %c0_i32_0 = arith.constant 0 : i32
    %c0_i32_1 = arith.constant 0 : i32
    return %c0_i32, %c0_i32_0 : i32, i32
  }
  func.func @transform_3(%arg0: i32) -> (i32, i32) {
    %c0_i32 = arith.constant 0 : i32
    %c0_i32_0 = arith.constant 0 : i32
    return %c0_i32, %arg0 : i32, i32
  }
}

</mosaic_0001>

<llo_original>
// kernel: tpu_custom_call.1
$region0: #{tpu_custom_call.1}
  #allocation0 [shape = 'u32[]', space=smem, size = 0x4, offset = 0x4, fixed_abs, tag = 'smem constant byte address 0x4 - core index']
  #allocation1 [shape = 'u32[144,128]{1,0:T(1,128)}', space=vmem, size = 0x12000, scoped, tag = 'internal scratch']
  %s0 = inlined_call_operand.hbm [shape: f32[4,1024], index: 0, kind: input, shape index: {}]
  %s1 = inlined_call_operand.vmem [shape: bf16[4,4], index: 1, kind: input, shape index: {}]
  %s2 = inlined_call_operand.vmem [shape: f32[4,1], index: 2, kind: input, shape index: {}]
  %s3 = inlined_call_operand.hbm [shape: f32[4,1024], index: 3, kind: output, shape index: {}]
  %s4 = sld [smem:[#allocation0]]
  $region26: #{tpu_custom_call.1} parent=0
    _
  %s6 = ssub.s32 1, %s4
  %s7 = scalar_select 0, %s6, %s4
  $region1: #{tpu_custom_call.1} parent=0
    #allocation2 [shape = 'u8[16384]{0}', space=vmem, size = 0x4000, scoped, tag = 'input window, operand 0, single buffered']
    #allocation3 [shape = 's32[1]{0}', space=sflag, size = 0x4, scoped, tag = 'scoped memory for tpu_custom_call.1']
    #allocation4 [shape = 's32[1]{0}', space=sflag, size = 0x4, scoped, tag = 'scoped memory for tpu_custom_call.1']
    #allocation5 [shape = 'u8[16384]{0}', space=vmem, size = 0x4000, scoped, tag = 'output window, operand 0, single buffered']
    %8 = vsyncpa [#allocation3], 0
    %9 = vsyncpa [#allocation4], 0
    // Predicated region
    $region2: #{tpu_custom_call.1} parent=1 // pred_check
      _
    $region3: #{tpu_custom_call.1} parent=1 // pred_check_branch
      %11 = sbr.rel (0) target = $region5
    $region4: #{tpu_custom_call.1} parent=1 // pred_region
      %s13 = ssub.s32 512, 512
      %14 = vsyncadd [#allocation3], %s13
      %s16 = sshll.u32 [#allocation2], 4
      %s17 = int_to_ptr.vmem [resolvable:$true] %s16
      %19 = dma.hbm_to_vmem [thread:$0]  %s0, 512, %s17, [#allocation3]
    $region5: #{tpu_custom_call.1} parent=1 // pred_fallthru
      _
    // Predicated region
    $region6: #{tpu_custom_call.1} parent=1 // pred_check
      _
    $region7: #{tpu_custom_call.1} parent=1 // pred_check_branch
      %21 = sbr.rel (0) target = $region9
    $region8: #{tpu_custom_call.1} parent=1 // pred_region
      _
    $region9: #{tpu_custom_call.1} parent=1 // pred_fallthru
      _
    // Predicated region
    $region10: #{tpu_custom_call.1} parent=1 // pred_check
      _
    $region11: #{tpu_custom_call.1} parent=1 // pred_check_branch
      %23 = sbr.rel (0) target = $region13
    $region12: #{tpu_custom_call.1} parent=1 // pred_region
      _
    $region13: #{tpu_custom_call.1} parent=1 // pred_fallthru
      _
    // Predicated region
    $region14: #{tpu_custom_call.1} parent=1 // pred_check
      _
    $region15: #{tpu_custom_call.1} parent=1 // pred_check_branch
      %25 = sbr.rel (0) target = $region17
    $region16: #{tpu_custom_call.1} parent=1 // pred_region
      %26 = dma.done [#allocation3], 512
    $region17: #{tpu_custom_call.1} parent=1 // pred_fallthru
      _
    %v28 = vld [vmem:[%s1] sm:$0x3]
    %v29 = vld [vmem:[#allocation2] sm:$0xff]
    %v30 = vld [vmem:[#allocation2 + $0x8] sm:$0xff]
    %v31 = vld [vmem:[#allocation2 + $0x10] sm:$0xff]
    %v32 = vld [vmem:[#allocation2 + $0x18] sm:$0xff]
    %v37 = vcombine.high %v29, %v29
    %v38 = vcombine.high %v30, %v30
    %v39 = vcombine.high %v31, %v31
    %v40 = vcombine.high %v32, %v32
    %v45 = vpack.c.bf16 %v29, %v29
    %v46 = vpack.c.bf16 %v37, %v37
    %v47 = vpack.c.bf16 %v30, %v30
    %v48 = vpack.c.bf16 %v38, %v38
    %v49 = vpack.c.bf16 %v31, %v31
    %v50 = vpack.c.bf16 %v39, %v39
    %v51 = vpack.c.bf16 %v32, %v32
    %v52 = vpack.c.bf16 %v40, %v40
    %v53 = vld [vmem:[%s2] sm:$0xf]
    %55 = vset.pattern.permute.xlu0 0
    %56 = vperm.xlu0 %55, %v53
    %v57 = vpop.permute.xlu0 %56
    %vm59 = vcmask 31744
    %v61 = vsel %vm59, %v28, 0
    %vm63 = vcmask 1041408
    %v65 = vsel %vm63, %v45, 0
    %v68 = vsel %vm63, %v46, 0
    %v71 = vsel %vm63, %v47, 0
    %v74 = vsel %vm63, %v48, 0
    %v77 = vsel %vm63, %v49, 0
    %v80 = vsel %vm63, %v50, 0
    %v83 = vsel %vm63, %v51, 0
    %v86 = vsel %vm63, %v52, 0
    %88 = vmatprep.subr.bf16.mxu0 %v68
    %89 = vmatpush1.bf16.msra.mxu0 %v65
    %90 = vmatprep.subr.bf16.mxu0 0
    %91 = vmatpush1.bf16.msra.mxu0 0
    %92 = vmatprep.subr.bf16.mxu0 0
    %93 = vmatpush1.bf16.msra.mxu0 0
    %94 = vmatprep.subr.bf16.mxu0 0
    %95 = vmatpush1.bf16.msra.mxu0 0
    %96 = vmatprep.subr.bf16.mxu0 0
    %97 = vmatpush1.bf16.msra.mxu0 0
    %98 = vmatprep.subr.bf16.mxu0 0
    %99 = vmatpush1.bf16.msra.mxu0 0
    %100 = vmatprep.subr.bf16.mxu0 0
    %101 = vmatpush1.bf16.msra.mxu0 0
    %102 = vmatprep.subr.bf16.mxu0 0
    %103 = vmatpush1.bf16.msra.mxu0 0
    %104 = vmatprep.subr.bf16.mxu0 0
    %105 = vmatpush1.bf16.msra.mxu0 0
    %106 = vmatprep.subr.bf16.mxu0 0
    %107 = vmatpush1.bf16.msra.mxu0 0
    %108 = vmatprep.subr.bf16.mxu0 0
    %109 = vmatpush1.bf16.msra.mxu0 0
    %110 = vmatprep.subr.bf16.mxu0 0
    %111 = vmatpush1.bf16.msra.mxu0 0
    %112 = vmatprep.subr.bf16.mxu0 0
    %113 = vmatpush1.bf16.msra.mxu0 0
    %114 = vmatprep.subr.bf16.mxu0 0
    %115 = vmatpush1.bf16.msra.mxu0 0
    %116 = vmatprep.subr.bf16.mxu0 0
    %117 = vmatpush1.bf16.msra.mxu0 0
    %118 = vmatprep.subr.bf16.mxu0 0
    %119 = vmatpush1.bf16.msra.mxu0 0
    %120 = vmatprep.mubr.bf16.mxu0 0
    %121 = vmatmul.mubr.bf16.gmra.mrb[0].mxu0 %v61
    %v122 = vpop.f32.mrb[0].mxu0
    %v123 = vadd.f32 %v57, %v122
    %v124 = vpop.f32.mrb[0].mxu0
    %v125 = vadd.f32 %v57, %v124
    %v126 = vpop.f32.mrb[0].mxu0
    %v127 = vpop.f32.mrb[0].mxu0
    %128 = vdwg.mxu0
    %129 = vmatprep.subr.bf16.mxu0 %v74
    %130 = vmatpush1.bf16.msra.mxu0 %v71
    %131 = vmatprep.subr.bf16.mxu0 0
    %132 = vmatpush1.bf16.msra.mxu0 0
    %133 = vmatprep.subr.bf16.mxu0 0
    %134 = vmatpush1.bf16.msra.mxu0 0
    %135 = vmatprep.subr.bf16.mxu0 0
    %136 = vmatpush1.bf16.msra.mxu0 0
    %137 = vmatprep.subr.bf16.mxu0 0
    %138 = vmatpush1.bf16.msra.mxu0 0
    %139 = vmatprep.subr.bf16.mxu0 0
    %140 = vmatpush1.bf16.msra.mxu0 0
    %141 = vmatprep.subr.bf16.mxu0 0
    %142 = vmatpush1.bf16.msra.mxu0 0
    %143 = vmatprep.subr.bf16.mxu0 0
    %144 = vmatpush1.bf16.msra.mxu0 0
    %145 = vmatprep.subr.bf16.mxu0 0
    %146 = vmatpush1.bf16.msra.mxu0 0
    %147 = vmatprep.subr.bf16.mxu0 0
    %148 = vmatpush1.bf16.msra.mxu0 0
    %149 = vmatprep.subr.bf16.mxu0 0
    %150 = vmatpush1.bf16.msra.mxu0 0
    %151 = vmatprep.subr.bf16.mxu0 0
    %152 = vmatpush1.bf16.msra.mxu0 0
    %153 = vmatprep.subr.bf16.mxu0 0
    %154 = vmatpush1.bf16.msra.mxu0 0
    %155 = vmatprep.subr.bf16.mxu0 0
    %156 = vmatpush1.bf16.msra.mxu0 0
    %157 = vmatprep.subr.bf16.mxu0 0
    %158 = vmatpush1.bf16.msra.mxu0 0
    %159 = vmatprep.subr.bf16.mxu0 0
    %160 = vmatpush1.bf16.msra.mxu0 0
    %161 = vmatprep.mubr.bf16.mxu0 0
    %162 = vmatmul.mubr.bf16.gmra.mrb[0].mxu0 %v61
    %v163 = vpop.f32.mrb[0].mxu0
    %v164 = vadd.f32 %v57, %v163
    %v165 = vpop.f32.mrb[0].mxu0
    %v166 = vadd.f32 %v57, %v165
    %v167 = vpop.f32.mrb[0].mxu0
    %v168 = vpop.f32.mrb[0].mxu0
    %169 = vdwg.mxu0
    %170 = vmatprep.subr.bf16.mxu0 %v80
    %171 = vmatpush1.bf16.msra.mxu0 %v77
    %172 = vmatprep.subr.bf16.mxu0 0
    %173 = vmatpush1.bf16.msra.mxu0 0
    %174 = vmatprep.subr.bf16.mxu0 0
    %175 = vmatpush1.bf16.msra.mxu0 0
    %176 = vmatprep.subr.bf16.mxu0 0
    %177 = vmatpush1.bf16.msra.mxu0 0
    %178 = vmatprep.subr.bf16.mxu0 0
    %179 = vmatpush1.bf16.msra.mxu0 0
    %180 = vmatprep.subr.bf16.mxu0 0
    %181 = vmatpush1.bf16.msra.mxu0 0
    %182 = vmatprep.subr.bf16.mxu0 0
    %183 = vmatpush1.bf16.msra.mxu0 0
    %184 = vmatprep.subr.bf16.mxu0 0
    %185 = vmatpush1.bf16.msra.mxu0 0
    %186 = vmatprep.subr.bf16.mxu0 0
    %187 = vmatpush1.bf16.msra.mxu0 0
    %188 = vmatprep.subr.bf16.mxu0 0
    %189 = vmatpush1.bf16.msra.mxu0 0
    %190 = vmatprep.subr.bf16.mxu0 0
    %191 = vmatpush1.bf16.msra.mxu0 0
    %192 = vmatprep.subr.bf16.mxu0 0
    %193 = vmatpush1.bf16.msra.mxu0 0
    %194 = vmatprep.subr.bf16.mxu0 0
    %195 = vmatpush1.bf16.msra.mxu0 0
    %196 = vmatprep.subr.bf16.mxu0 0
    %197 = vmatpush1.bf16.msra.mxu0 0
    %198 = vmatprep.subr.bf16.mxu0 0
    %199 = vmatpush1.bf16.msra.mxu0 0
    %200 = vmatprep.subr.bf16.mxu0 0
    %201 = vmatpush1.bf16.msra.mxu0 0
    %202 = vmatprep.mubr.bf16.mxu0 0
    %203 = vmatmul.mubr.bf16.gmra.mrb[0].mxu0 %v61
    %v204 = vpop.f32.mrb[0].mxu0
    %v205 = vadd.f32 %v57, %v204
    %v206 = vpop.f32.mrb[0].mxu0
    %v207 = vadd.f32 %v57, %v206
    %v208 = vpop.f32.mrb[0].mxu0
    %v209 = vpop.f32.mrb[0].mxu0
    %210 = vdwg.mxu0
    %211 = vmatprep.subr.bf16.mxu0 %v86
    %212 = vmatpush1.bf16.msra.mxu0 %v83
    %213 = vmatprep.subr.bf16.mxu0 0
    %214 = vmatpush1.bf16.msra.mxu0 0
    %215 = vmatprep.subr.bf16.mxu0 0
    %216 = vmatpush1.bf16.msra.mxu0 0
    %217 = vmatprep.subr.bf16.mxu0 0
    %218 = vmatpush1.bf16.msra.mxu0 0
    %219 = vmatprep.subr.bf16.mxu0 0
    %220 = vmatpush1.bf16.msra.mxu0 0
    %221 = vmatprep.subr.bf16.mxu0 0
    %222 = vmatpush1.bf16.msra.mxu0 0
    %223 = vmatprep.subr.bf16.mxu0 0
    %224 = vmatpush1.bf16.msra.mxu0 0
    %225 = vmatprep.subr.bf16.mxu0 0
    %226 = vmatpush1.bf16.msra.mxu0 0
    %227 = vmatprep.subr.bf16.mxu0 0
    %228 = vmatpush1.bf16.msra.mxu0 0
    %229 = vmatprep.subr.bf16.mxu0 0
    %230 = vmatpush1.bf16.msra.mxu0 0
    %231 = vmatprep.subr.bf16.mxu0 0
    %232 = vmatpush1.bf16.msra.mxu0 0
    %233 = vmatprep.subr.bf16.mxu0 0
    %234 = vmatpush1.bf16.msra.mxu0 0
    %235 = vmatprep.subr.bf16.mxu0 0
    %236 = vmatpush1.bf16.msra.mxu0 0
    %237 = vmatprep.subr.bf16.mxu0 0
    %238 = vmatpush1.bf16.msra.mxu0 0
    %239 = vmatprep.subr.bf16.mxu0 0
    %240 = vmatpush1.bf16.msra.mxu0 0
    %241 = vmatprep.subr.bf16.mxu0 0
    %242 = vmatpush1.bf16.msra.mxu0 0
    %243 = vmatprep.mubr.bf16.mxu0 0
    %244 = vmatmul.mubr.bf16.gmra.mrb[0].mxu0 %v61
    %v245 = vpop.f32.mrb[0].mxu0
    %v246 = vadd.f32 %v57, %v245
    %v247 = vpop.f32.mrb[0].mxu0
    %v248 = vadd.f32 %v57, %v247
    %v249 = vpop.f32.mrb[0].mxu0
    %v250 = vpop.f32.mrb[0].mxu0
    %251 = vdwg.mxu0
    %v260 = vcombine.low %v123, %v125
    %v261 = vcombine.low %v164, %v166
    %v262 = vcombine.low %v205, %v207
    %v263 = vcombine.low %v246, %v248
    %268 = vst [vmem:[#allocation5] sm:$0xff] %v260
    %269 = vst [vmem:[#allocation5 + $0x8] sm:$0xff] %v261
    %270 = vst [vmem:[#allocation5 + $0x10] sm:$0xff] %v262
    %271 = vst [vmem:[#allocation5 + $0x18] sm:$0xff] %v263
    // Predicated region
    $region18: #{tpu_custom_call.1} parent=1 // pred_check
      _
    $region19: #{tpu_custom_call.1} parent=1 // pred_check_branch
      %273 = sbr.rel (0) target = $region21
    $region20: #{tpu_custom_call.1} parent=1 // pred_region
      %s275 = ssub.s32 512, 512
      %276 = vsyncadd [#allocation4], %s275
      %s278 = sshll.u32 [#allocation5], 4
      %s279 = int_to_ptr.vmem [resolvable:$true] %s278
      %281 = dma.vmem_to_hbm [thread:$0]  %s279, 512, %s3, [#allocation4]
    $region21: #{tpu_custom_call.1} parent=1 // pred_fallthru
      _
    // Predicated region
    $region22: #{tpu_custom_call.1} parent=1 // pred_check
      _
    $region23: #{tpu_custom_call.1} parent=1 // pred_check_branch
      %283 = sbr.rel (0) target = $region25
    $region24: #{tpu_custom_call.1} parent=1 // pred_region
      %284 = dma.done [#allocation4], 512
    $region25: #{tpu_custom_call.1} parent=1 // pred_fallthru
      _
    %285 = vsyncpa [#allocation3], 1
    %286 = vsyncpa [#allocation4], 1

</llo_original>
